<compile_context>
chip_gen: v7x
topology: tpu7x:2x2x1
jax: 0.10.0
libtpu: 0.0.40
codegen_flags: <defaults>
</compile_context>

<pallas_src>
import functools

import jax
import jax.numpy as jnp
from jax.experimental import pallas as pl
from jax.experimental.pallas import tpu as pltpu

NUM_GROUPS = 8
EPS = 1e-5


def _groupnorm_kernel(x_ref, gamma_ref, beta_ref, o_ref, *, inv_n):
    # x_ref: (1, Cg, HW) lane-dense block for one (batch, group)
    x = x_ref[...].astype(jnp.float32)

    # One-pass statistics (single sweep over the block).
    s = jnp.sum(x)
    ss = jnp.sum(x * x)
    mean = s * inv_n
    var = jnp.maximum(ss * inv_n - mean * mean, 0.0)  # clamp vs. cancellation
    inv = jax.lax.rsqrt(var + EPS)

    # Per-channel affine folded into a single FMA per element.
    gamma = gamma_ref[...].astype(jnp.float32)  # (1, Cg, 1)
    beta = beta_ref[...].astype(jnp.float32)    # (1, Cg, 1)
    scale = gamma * inv                          # broadcast along lanes (HW)
    shift = beta - mean * scale
    o_ref[...] = (x * scale + shift).astype(o_ref.dtype)


def group_norm(x, gamma, beta):
    """GroupNorm(num_groups=8, eps=1e-5, affine=True) on NCHW input."""
    N, C, H, W = x.shape
    G = NUM_GROUPS
    assert C % G == 0, "channels must be divisible by num_groups"
    Cg = C // G
    HW = H * W

    # Free views of contiguous NCHW data.
    x2 = x.reshape(N * G, Cg, HW)
    gamma3 = gamma.reshape(G, Cg, 1)
    beta3 = beta.reshape(G, Cg, 1)

    # VMEM budget: input + output double-buffered plus in-kernel f32 temporaries.
    io_block = Cg * HW * x.dtype.itemsize
    f32_block = Cg * HW * 4
    vmem_need = 4 * io_block + 4 * f32_block + (1 << 20)
    vmem_limit = int(min(max(vmem_need, 32 << 20), 48 << 20))  # stay under v7x 64 MiB
    # TODO(synk): for very large groups (Cg*H*W block > ~12 MiB) add a spatial
    # reduction grid axis with sum/sumsq VMEM accumulators instead of one big block.

    kernel = functools.partial(_groupnorm_kernel, inv_n=1.0 / float(Cg * HW))

    out = pl.pallas_call(
        kernel,
        out_shape=jax.ShapeDtypeStruct((N * G, Cg, HW), x.dtype),
        grid_spec=pltpu.PrefetchScalarGridSpec(
            num_scalar_prefetch=0,
            grid=(N * G,),
            in_specs=[
                pl.BlockSpec((1, Cg, HW), lambda i: (i, 0, 0)),
                pl.BlockSpec((1, Cg, 1), lambda i: (i % G, 0, 0)),
                pl.BlockSpec((1, Cg, 1), lambda i: (i % G, 0, 0)),
            ],
            out_specs=pl.BlockSpec((1, Cg, HW), lambda i: (i, 0, 0)),
        ),
        compiler_params=pltpu.CompilerParams(
            dimension_semantics=("parallel",),
            vmem_limit_bytes=vmem_limit,
        ),
    )(x2, gamma3, beta3)

    return out.reshape(N, C, H, W)


def group_norm_ref(x, gamma, beta):
    # pure-JAX reference for correctness check (matches PyTorch GroupNorm)
    N, C, H, W = x.shape
    G = NUM_GROUPS
    xg = x.reshape(N, G, C // G, H, W).astype(jnp.float32)
    mean = xg.mean(axis=(2, 3, 4), keepdims=True)
    var = ((xg - mean) ** 2).mean(axis=(2, 3, 4), keepdims=True)
    xn = (xg - mean) * jax.lax.rsqrt(var + EPS)
    xn = xn.reshape(N, C, H, W)
    return (xn * gamma.reshape(1, C, 1, 1) + beta.reshape(1, C, 1, 1)).astype(x.dtype)


if __name__ == "__main__":
    key = jax.random.PRNGKey(0)
    N, C, H, W = 2, 16, 16, 16  # C divisible by 8 groups
    x = jax.random.normal(key, (N, C, H, W), dtype=jnp.float32)

    # Deterministic affine params (PyTorch default init is weight=1, bias=0;
    # perturbed deterministically so the affine path is actually exercised).
    gamma = 1.0 + 0.1 * jnp.arange(C, dtype=jnp.float32)
    beta = 0.01 * jnp.arange(C, dtype=jnp.float32)

    out = group_norm(x, gamma, beta)
    out = jax.block_until_ready(out)

    ref = group_norm_ref(x, gamma, beta)
    assert jnp.allclose(out, ref, atol=1e-4, rtol=1e-4), "mismatch vs reference"

    print("KERNEL_OK")
</pallas_src>

<mosaic_0001>
module attributes {stable_mosaic.version = 11 : i64} {
  func.func @_groupnorm_kernel(%arg0: i32, %arg1: memref<1x2x256xf32, #tpu.memory_space<vmem>>, %arg2: memref<1x2x1xf32, #tpu.memory_space<vmem>>, %arg3: memref<1x2x1xf32, #tpu.memory_space<vmem>>, %arg4: memref<1x2x256xf32, #tpu.memory_space<vmem>>) attributes {dimension_semantics = [#tpu.dimension_semantics<parallel>], iteration_bounds = array<i64: 16>, scalar_prefetch = 0 : i64, scratch_operands = 0 : i64, tpu.core_type = #tpu.core_type<tc>, window_params = [{transform_indices = @transform_0, window_bounds = array<i64: 1, 2, 256>}, {transform_indices = @transform_1, window_bounds = array<i64: 1, 2, 1>}, {transform_indices = @transform_2, window_bounds = array<i64: 1, 2, 1>}, {transform_indices = @transform_3, window_bounds = array<i64: 1, 2, 256>}]} {
    %c0 = arith.constant 0 : index
    %c0_0 = arith.constant 0 : index
    %c0_1 = arith.constant 0 : index
    %0 = vector.load %arg1[%c0, %c0_0, %c0_1] : memref<1x2x256xf32, #tpu.memory_space<vmem>>, vector<1x2x256xf32>
    %1 = vector.shape_cast %0 : vector<1x2x256xf32> to vector<1x1x2x256xf32>
    %cst = arith.constant dense<0.000000e+00> : vector<1xf32>
    %2 = vector.multi_reduction <add>, %1, %cst [1, 2, 3] : vector<1x1x2x256xf32> to vector<1xf32>
    %3 = vector.shape_cast %2 : vector<1xf32> to vector<1x1x1x1xf32>
    %4 = vector.extract %3[0, 0, 0, 0] : f32 from vector<1x1x1x1xf32>
    %5 = arith.mulf %0, %0 : vector<1x2x256xf32>
    %6 = vector.shape_cast %5 : vector<1x2x256xf32> to vector<1x1x2x256xf32>
    %cst_2 = arith.constant dense<0.000000e+00> : vector<1xf32>
    %7 = vector.multi_reduction <add>, %6, %cst_2 [1, 2, 3] : vector<1x1x2x256xf32> to vector<1xf32>
    %8 = vector.shape_cast %7 : vector<1xf32> to vector<1x1x1x1xf32>
    %9 = vector.extract %8[0, 0, 0, 0] : f32 from vector<1x1x1x1xf32>
    %cst_3 = arith.constant 0.001953125 : f32
    %10 = arith.mulf %4, %cst_3 : f32
    %cst_4 = arith.constant 0.001953125 : f32
    %11 = arith.mulf %9, %cst_4 : f32
    %12 = arith.mulf %10, %10 : f32
    %13 = arith.subf %11, %12 : f32
    %cst_5 = arith.constant 0.000000e+00 : f32
    %14 = arith.maximumf %13, %cst_5 : f32
    %cst_6 = arith.constant 9.99999974E-6 : f32
    %15 = arith.addf %14, %cst_6 : f32
    %16 = math.rsqrt %15 : f32
    %c0_7 = arith.constant 0 : index
    %c0_8 = arith.constant 0 : index
    %c0_9 = arith.constant 0 : index
    %17 = vector.load %arg2[%c0_7, %c0_8, %c0_9] : memref<1x2x1xf32, #tpu.memory_space<vmem>>, vector<1x2x1xf32>
    %c0_10 = arith.constant 0 : index
    %c0_11 = arith.constant 0 : index
    %c0_12 = arith.constant 0 : index
    %18 = vector.load %arg3[%c0_10, %c0_11, %c0_12] : memref<1x2x1xf32, #tpu.memory_space<vmem>>, vector<1x2x1xf32>
    %19 = vector.broadcast %16 : f32 to vector<1x2x1xf32>
    %20 = arith.mulf %17, %19 : vector<1x2x1xf32>
    %21 = vector.broadcast %10 : f32 to vector<1x2x1xf32>
    %22 = arith.mulf %21, %20 : vector<1x2x1xf32>
    %23 = arith.subf %18, %22 : vector<1x2x1xf32>
    %24 = vector.broadcast %20 : vector<1x2x1xf32> to vector<1x2x256xf32>
    %25 = arith.mulf %0, %24 : vector<1x2x256xf32>
    %26 = vector.broadcast %23 : vector<1x2x1xf32> to vector<1x2x256xf32>
    %27 = arith.addf %25, %26 : vector<1x2x256xf32>
    %c0_13 = arith.constant 0 : index
    %c0_14 = arith.constant 0 : index
    %c0_15 = arith.constant 0 : index
    %28 = vector.load %arg4[%c0_13, %c0_14, %c0_15] : memref<1x2x256xf32, #tpu.memory_space<vmem>>, vector<1x2x256xf32>
    tpu.vector_store %arg4[%c0_13, %c0_14, %c0_15], %27 {strides = array<i32>} : memref<1x2x256xf32, #tpu.memory_space<vmem>>, vector<1x2x256xf32>,
    return
  }
  func.func @transform_0(%arg0: i32) -> (i32, i32, i32) {
    %c0_i32 = arith.constant 0 : i32
    %c0_i32_0 = arith.constant 0 : i32
    %c0_i32_1 = arith.constant 0 : i32
    return %arg0, %c0_i32, %c0_i32_0 : i32, i32, i32
  }
  func.func @transform_1(%arg0: i32) -> (i32, i32, i32) {
    %c8_i32 = arith.constant 8 : i32
    %c0_i32 = arith.constant 0 : i32
    %0 = arith.cmpi eq, %c8_i32, %c0_i32 : i32
    %c1_i32 = arith.constant 1 : i32
    %1 = arith.select %0, %c1_i32, %c8_i32 : i32
    %2 = arith.remsi %arg0, %1 : i32
    %c0_i32_0 = arith.constant 0 : i32
    %3 = arith.cmpi ne, %2, %c0_i32_0 : i32
    %c0_i32_1 = arith.constant 0 : i32
    %4 = arith.cmpi slt, %2, %c0_i32_1 : i32
    %c0_i32_2 = arith.constant 0 : i32
    %5 = arith.cmpi slt, %1, %c0_i32_2 : i32
    %6 = arith.xori %4, %5 : i1
    %7 = arith.andi %6, %3 : i1
    %8 = arith.addi %2, %1 : i32
    %9 = arith.select %7, %8, %2 : i32
    %c0_i32_3 = arith.constant 0 : i32
    %c0_i32_4 = arith.constant 0 : i32
    %c0_i32_5 = arith.constant 0 : i32
    return %9, %c0_i32_3, %c0_i32_4 : i32, i32, i32
  }
  func.func @transform_2(%arg0: i32) -> (i32, i32, i32) {
    %c8_i32 = arith.constant 8 : i32
    %c0_i32 = arith.constant 0 : i32
    %0 = arith.cmpi eq, %c8_i32, %c0_i32 : i32
    %c1_i32 = arith.constant 1 : i32
    %1 = arith.select %0, %c1_i32, %c8_i32 : i32
    %2 = arith.remsi %arg0, %1 : i32
    %c0_i32_0 = arith.constant 0 : i32
    %3 = arith.cmpi ne, %2, %c0_i32_0 : i32
    %c0_i32_1 = arith.constant 0 : i32
    %4 = arith.cmpi slt, %2, %c0_i32_1 : i32
    %c0_i32_2 = arith.constant 0 : i32
    %5 = arith.cmpi slt, %1, %c0_i32_2 : i32
    %6 = arith.xori %4, %5 : i1
    %7 = arith.andi %6, %3 : i1
    %8 = arith.addi %2, %1 : i32
    %9 = arith.select %7, %8, %2 : i32
    %c0_i32_3 = arith.constant 0 : i32
    %c0_i32_4 = arith.constant 0 : i32
    %c0_i32_5 = arith.constant 0 : i32
    return %9, %c0_i32_3, %c0_i32_4 : i32, i32, i32
  }
  func.func @transform_3(%arg0: i32) -> (i32, i32, i32) {
    %c0_i32 = arith.constant 0 : i32
    %c0_i32_0 = arith.constant 0 : i32
    %c0_i32_1 = arith.constant 0 : i32
    return %arg0, %c0_i32, %c0_i32_0 : i32, i32, i32
  }
}

</mosaic_0001>

<llo_original>
// kernel: tpu_custom_call.1
$region0: #{tpu_custom_call.1}
  #allocation0 [shape = 'u32[]', space=smem, size = 0x4, offset = 0x4, fixed_abs, tag = 'smem constant byte address 0x4 - core index']
  #allocation1 [shape = 'u32[144,128]{1,0:T(1,128)}', space=vmem, size = 0x12000, scoped, tag = 'internal scratch']
  %s0 = inlined_call_operand.hbm [shape: f32[16,2,256], index: 0, kind: input, shape index: {}]
  %s1 = inlined_call_operand.vmem [shape: f32[8,2,1], index: 1, kind: input, shape index: {}]
  %s2 = inlined_call_operand.vmem [shape: f32[8,2,1], index: 2, kind: input, shape index: {}]
  %s3 = inlined_call_operand.hbm [shape: f32[16,2,256], index: 3, kind: output, shape index: {}]
  %s4 = sld [smem:[#allocation0]]
  $region49: #{tpu_custom_call.1} parent=0
    _
  %s6 = ssub.s32 1, %s4
  %s7 = scalar_select 0, %s6, %s4
  $region1: #{tpu_custom_call.1} parent=0
    #allocation2 [shape = 'u8[4096]{0}', space=vmem, size = 0x1000, scoped, tag = 'input window, operand 0']
    #allocation3 [shape = 's32[2]{0}', space=sflag, size = 0x8, scoped, tag = 'scoped memory for tpu_custom_call.1']
    #allocation4 [shape = 's32[2]{0}', space=sflag, size = 0x8, scoped, tag = 'scoped memory for tpu_custom_call.1']
    #allocation5 [shape = 'u8[4096]{0}', space=vmem, size = 0x1000, scoped, tag = 'output window, operand 0']
    %8 = vsyncpa [#allocation3], 0
    %s9 = scalar_lea.sflag [#allocation3], 1
    %10 = vsyncpa %s9, 0
    %11 = vsyncpa [#allocation4], 0
    %s12 = scalar_lea.sflag [#allocation4], 1
    %13 = vsyncpa %s12, 0
    loop: start=0, step=1, limit=18
    $region2: #{tpu_custom_call.1} parent=1 // loop_pre_header
      _
    $region3: #{tpu_custom_call.1} parent=1 // loop_header
      %s15 = sphi 0, %s19
      %p16 = scmp.ge.s32.totalorder %s15, 18
      %s25 = sphi 0, %s27
      %s28 = sphi 0, %s25
      %s29 = sphi 0, %s28
      %s45 = sphi 0, %s29
      %s75 = sphi 0, %s77
      %s78 = sphi 0, %s75
      %s79 = sphi 0, %s78
      %s95 = sphi 0, %s79
      %s125 = sphi 0, %s127
      %s128 = sphi 0, %s125
      %s129 = sphi 0, %s128
      %s145 = sphi 0, %s129
      %s151 = sphi 0, %s153
      %s154 = sphi 0, %s151
      %s155 = sphi 0, %s154
      %s171 = sphi 0, %s155
    $region4: #{tpu_custom_call.1} parent=1 // loop_header_branch
      %18 = sbr.rel (%p16) target = $region8
    $region5: #{tpu_custom_call.1} parent=1 // loop_body
      %s20 = ssub.s32 %s15, 1
      %s21 = ssub.s32 %s15, 2
      %s22 = sadd.s32 %s15, 1
      %s23 = ssub.s32 %s15, %s22
      %p24 = scmp.eq.s32.totalorder %s23, 0
      %s26 = sadd.s32 %s25, 1
      %s27 = scalar_select %p24, %s25, %s26
      %p30 = pneg %p24
      %p31 = scmp.eq.s32.totalorder %s15, 15
      %p32 = por %p30, %p31
      %p33 = scmp.ne.s32.totalorder %s25, %s28
      %p34 = scmp.eq.s32.totalorder %s15, 0
      %p35 = por %p33, %p34
      %p36 = scmp.ne.s32.totalorder %s25, %s28
      %p37 = scmp.eq.s32.totalorder %s20, 15
      %p38 = por %p36, %p37
      %p39 = scmp.ne.s32.totalorder %s28, %s29
      %p40 = scmp.eq.s32.totalorder %s20, 0
      %p41 = por %p39, %p40
      %p42 = scmp.ne.s32.totalorder %s28, %s29
      %p43 = scmp.eq.s32.totalorder %s21, 15
      %p44 = por %p42, %p43
      %p46 = scmp.ne.s32.totalorder %s29, %s45
      %p47 = scmp.eq.s32.totalorder %s21, 0
      %p48 = por %p46, %p47
      %p49 = scmp.lt.s32.totalorder %s15, 0
      %s50 = ssub.s32 0, %s15
      %s51 = scalar_select %p49, %s50, %s15
      %s52 = sand.u32 %s51, 7
      %s53 = ssub.s32 0, %s52
      %s54 = scalar_select %p49, %s53, %s52
      %p55 = scmp.ne.s32.totalorder %s54, 0
      %p56 = scmp.lt.s32.totalorder %s54, 0
      %p57 = pnand %p56, %p55
      %p58 = pneg %p57
      %s59 = sadd.s32 %s54, 8
      %s60 = scalar_select %p58, %s59, %s54
      %p61 = scmp.lt.s32.totalorder %s22, 0
      %s62 = ssub.s32 0, %s22
      %s63 = scalar_select %p61, %s62, %s22
      %s64 = sand.u32 %s63, 7
      %s65 = ssub.s32 0, %s64
      %s66 = scalar_select %p61, %s65, %s64
      %p67 = scmp.ne.s32.totalorder %s66, 0
      %p68 = scmp.lt.s32.totalorder %s66, 0
      %p69 = pnand %p68, %p67
      %p70 = pneg %p69
      %s71 = sadd.s32 %s66, 8
      %s72 = scalar_select %p70, %s71, %s66
      %s73 = ssub.s32 %s60, %s72
      %p74 = scmp.eq.s32.totalorder %s73, 0
      %s76 = sadd.s32 %s75, 1
      %s77 = scalar_select %p74, %s75, %s76
      %p80 = pneg %p74
      %p81 = scmp.eq.s32.totalorder %s15, 15
      %p82 = por %p80, %p81
      %p83 = scmp.ne.s32.totalorder %s75, %s78
      %p84 = scmp.eq.s32.totalorder %s15, 0
      %p85 = por %p83, %p84
      %p86 = scmp.ne.s32.totalorder %s75, %s78
      %p87 = scmp.eq.s32.totalorder %s20, 15
      %p88 = por %p86, %p87
      %p89 = scmp.ne.s32.totalorder %s78, %s79
      %p90 = scmp.eq.s32.totalorder %s20, 0
      %p91 = por %p89, %p90
      %p92 = scmp.ne.s32.totalorder %s78, %s79
      %p93 = scmp.eq.s32.totalorder %s21, 15
      %p94 = por %p92, %p93
      %p96 = scmp.ne.s32.totalorder %s79, %s95
      %p97 = scmp.eq.s32.totalorder %s21, 0
      %p98 = por %p96, %p97
      %p99 = scmp.lt.s32.totalorder %s15, 0
      %s100 = ssub.s32 0, %s15
      %s101 = scalar_select %p99, %s100, %s15
      %s102 = sand.u32 %s101, 7
      %s103 = ssub.s32 0, %s102
      %s104 = scalar_select %p99, %s103, %s102
      %p105 = scmp.ne.s32.totalorder %s104, 0
      %p106 = scmp.lt.s32.totalorder %s104, 0
      %p107 = pnand %p106, %p105
      %p108 = pneg %p107
      %s109 = sadd.s32 %s104, 8
      %s110 = scalar_select %p108, %s109, %s104
      %p111 = scmp.lt.s32.totalorder %s22, 0
      %s112 = ssub.s32 0, %s22
      %s113 = scalar_select %p111, %s112, %s22
      %s114 = sand.u32 %s113, 7
      %s115 = ssub.s32 0, %s114
      %s116 = scalar_select %p111, %s115, %s114
      %p117 = scmp.ne.s32.totalorder %s116, 0
      %p118 = scmp.lt.s32.totalorder %s116, 0
      %p119 = pnand %p118, %p117
      %p120 = pneg %p119
      %s121 = sadd.s32 %s116, 8
      %s122 = scalar_select %p120, %s121, %s116
      %s123 = ssub.s32 %s110, %s122
      %p124 = scmp.eq.s32.totalorder %s123, 0
      %s126 = sadd.s32 %s125, 1
      %s127 = scalar_select %p124, %s125, %s126
      %p130 = pneg %p124
      %p131 = scmp.eq.s32.totalorder %s15, 15
      %p132 = por %p130, %p131
      %p133 = scmp.ne.s32.totalorder %s125, %s128
      %p134 = scmp.eq.s32.totalorder %s15, 0
      %p135 = por %p133, %p134
      %p136 = scmp.ne.s32.totalorder %s125, %s128
      %p137 = scmp.eq.s32.totalorder %s20, 15
      %p138 = por %p136, %p137
      %p139 = scmp.ne.s32.totalorder %s128, %s129
      %p140 = scmp.eq.s32.totalorder %s20, 0
      %p141 = por %p139, %p140
      %p142 = scmp.ne.s32.totalorder %s128, %s129
      %p143 = scmp.eq.s32.totalorder %s21, 15
      %p144 = por %p142, %p143
      %p146 = scmp.ne.s32.totalorder %s129, %s145
      %p147 = scmp.eq.s32.totalorder %s21, 0
      %p148 = por %p146, %p147
      %s149 = ssub.s32 %s15, %s22
      %p150 = scmp.eq.s32.totalorder %s149, 0
      %s152 = sadd.s32 %s151, 1
      %s153 = scalar_select %p150, %s151, %s152
      %p156 = pneg %p150
      %p157 = scmp.eq.s32.totalorder %s15, 15
      %p158 = por %p156, %p157
      %p159 = scmp.ne.s32.totalorder %s151, %s154
      %p160 = scmp.eq.s32.totalorder %s15, 0
      %p161 = por %p159, %p160
      %p162 = scmp.ne.s32.totalorder %s151, %s154
      %p163 = scmp.eq.s32.totalorder %s20, 15
      %p164 = por %p162, %p163
      %p165 = scmp.ne.s32.totalorder %s154, %s155
      %p166 = scmp.eq.s32.totalorder %s20, 0
      %p167 = por %p165, %p166
      %p168 = scmp.ne.s32.totalorder %s154, %s155
      %p169 = scmp.eq.s32.totalorder %s21, 15
      %p170 = por %p168, %p169
      %p172 = scmp.ne.s32.totalorder %s155, %s171
      %p173 = scmp.eq.s32.totalorder %s21, 0
      %p174 = por %p172, %p173
      %p175 = scmp.le.s32.totalorder 1, %s15
      %p176 = scmp.lt.s32.totalorder %s15, 17
      %p177 = pnand %p175, %p176
      %p178 = pneg %p177
      // Predicated region
      $region9: #{tpu_custom_call.1} parent=5 // pred_check
        _
      $region10: #{tpu_custom_call.1} parent=5 // pred_check_branch
        %180 = sbr.rel (%p177) target = $region12
      $region11: #{tpu_custom_call.1} parent=5 // pred_region
        %s181 = ssub.s32 %s15, 1
      $region12: #{tpu_custom_call.1} parent=5 // pred_fallthru
        _
      %p182 = scmp.lt.s32.totalorder %s15, 16
      // Predicated region
      $region13: #{tpu_custom_call.1} parent=5 // pred_check
        %p183 = pneg %p182
      $region14: #{tpu_custom_call.1} parent=5 // pred_check_branch
        %185 = sbr.rel (%p183) target = $region16
      $region15: #{tpu_custom_call.1} parent=5 // pred_region
        // Predicated region
        $region17: #{tpu_custom_call.1} parent=15 // pred_check
          %p186 = pneg %p35
        $region18: #{tpu_custom_call.1} parent=15 // pred_check_branch
          %188 = sbr.rel (%p186) target = $region20
        $region19: #{tpu_custom_call.1} parent=15 // pred_region
          %s189 = sand.u32 %s25, 1
          %s190 = scalar_lea.sflag [#allocation3], %s189
          %s191 = sand.u32 %s25, 1
          %s192 = smul.addr %s191, 4
          %s193 = scalar_lea.vmem [#allocation2], %s192
          %s195 = ssub.s32 64, 64
          %196 = vsyncadd %s190, %s195
          %s197 = smul.addr %s15, 2
          %s198 = smul.addr %s197, 32
          %s199 = scalar_lea.hbm %s0, %s198
          %s201 = sshll.u32 %s193, 4
          %s202 = int_to_ptr.vmem [resolvable:$true] %s201
          %204 = dma.hbm_to_vmem [thread:$0]  %s199, 64, %s202, %s190
        $region20: #{tpu_custom_call.1} parent=15 // pred_fallthru
          _
        // Predicated region
        $region21: #{tpu_custom_call.1} parent=15 // pred_check
          %p205 = pneg %p85
        $region22: #{tpu_custom_call.1} parent=15 // pred_check_branch
          %207 = sbr.rel (%p205) target = $region24
        $region23: #{tpu_custom_call.1} parent=15 // pred_region
          %p208 = scmp.lt.s32.totalorder %s15, 0
          %s209 = ssub.s32 0, %s15
          %s210 = scalar_select %p208, %s209, %s15
          %s211 = sand.u32 %s210, 7
          %s212 = ssub.s32 0, %s211
          %s213 = scalar_select %p208, %s212, %s211
          %p214 = scmp.ne.s32.totalorder %s213, 0
          %p215 = scmp.lt.s32.totalorder %s213, 0
          %p216 = pnand %p215, %p214
          %p217 = pneg %p216
          %s218 = sadd.s32 %s213, 8
          %s219 = scalar_select %p217, %s218, %s213
          %p220 = scmp.lt.s32.totalorder %s219, 7
          %s221 = scalar_select %p220, %s219, 7
          %s222 = smul.addr %s221, 2
          %s223 = scalar_lea.vmem %s1, %s222
          %p224 = scmp.lt.s32.totalorder %s15, 0
          %s225 = ssub.s32 0, %s15
          %s226 = scalar_select %p224, %s225, %s15
          %s227 = sand.u32 %s226, 7
          %s228 = ssub.s32 0, %s227
          %s229 = scalar_select %p224, %s228, %s227
          %p230 = scmp.ne.s32.totalorder %s229, 0
          %p231 = scmp.lt.s32.totalorder %s229, 0
          %p232 = pnand %p231, %p230
          %p233 = pneg %p232
          %s234 = sadd.s32 %s229, 8
          %s235 = scalar_select %p233, %s234, %s229
        $region24: #{tpu_custom_call.1} parent=15 // pred_fallthru
          _
        // Predicated region
        $region25: #{tpu_custom_call.1} parent=15 // pred_check
          %p236 = pneg %p135
        $region26: #{tpu_custom_call.1} parent=15 // pred_check_branch
          %238 = sbr.rel (%p236) target = $region28
        $region27: #{tpu_custom_call.1} parent=15 // pred_region
          %p239 = scmp.lt.s32.totalorder %s15, 0
          %s240 = ssub.s32 0, %s15
          %s241 = scalar_select %p239, %s240, %s15
          %s242 = sand.u32 %s241, 7
          %s243 = ssub.s32 0, %s242
          %s244 = scalar_select %p239, %s243, %s242
          %p245 = scmp.ne.s32.totalorder %s244, 0
          %p246 = scmp.lt.s32.totalorder %s244, 0
          %p247 = pnand %p246, %p245
          %p248 = pneg %p247
          %s249 = sadd.s32 %s244, 8
          %s250 = scalar_select %p248, %s249, %s244
          %p251 = scmp.lt.s32.totalorder %s250, 7
          %s252 = scalar_select %p251, %s250, 7
          %s253 = smul.addr %s252, 2
          %s254 = scalar_lea.vmem %s2, %s253
          %p255 = scmp.lt.s32.totalorder %s15, 0
          %s256 = ssub.s32 0, %s15
          %s257 = scalar_select %p255, %s256, %s15
          %s258 = sand.u32 %s257, 7
          %s259 = ssub.s32 0, %s258
          %s260 = scalar_select %p255, %s259, %s258
          %p261 = scmp.ne.s32.totalorder %s260, 0
          %p262 = scmp.lt.s32.totalorder %s260, 0
          %p263 = pnand %p262, %p261
          %p264 = pneg %p263
          %s265 = sadd.s32 %s260, 8
          %s266 = scalar_select %p264, %s265, %s260
        $region28: #{tpu_custom_call.1} parent=15 // pred_fallthru
          _
      $region16: #{tpu_custom_call.1} parent=5 // pred_fallthru
        _
      %p267 = scmp.le.s32.totalorder 1, %s15
      %p268 = scmp.lt.s32.totalorder %s15, 17
      %p269 = pnand %p267, %p268
      %p270 = pneg %p269
      // Predicated region
      $region29: #{tpu_custom_call.1} parent=5 // pred_check
        _
      $region30: #{tpu_custom_call.1} parent=5 // pred_check_branch
        %272 = sbr.rel (%p269) target = $region32
      $region31: #{tpu_custom_call.1} parent=5 // pred_region
        %s273 = ssub.s32 %s15, 1
        %s274 = sand.u32 %s28, 1
        %s275 = scalar_lea.sflag [#allocation3], %s274
        %s276 = sand.u32 %s28, 1
        %s277 = smul.addr %s276, 4
        %s278 = scalar_lea.vmem [#allocation2], %s277
        // Predicated region
        $region33: #{tpu_custom_call.1} parent=31 // pred_check
          %p279 = pneg %p41
        $region34: #{tpu_custom_call.1} parent=31 // pred_check_branch
          %281 = sbr.rel (%p279) target = $region36
        $region35: #{tpu_custom_call.1} parent=31 // pred_region
          %282 = dma.done %s275, 64
        $region36: #{tpu_custom_call.1} parent=31 // pred_fallthru
          _
        %s283 = sand.u32 %s28, 1
        %s284 = scalar_lea.sflag [#allocation3], %s283
        %s285 = sand.u32 %s28, 1
        %s286 = smul.addr %s285, 4
        %s287 = scalar_lea.vmem [#allocation2], %s286
        %p288 = pneg %p41
        %p289 = pneg %p38
        %p290 = scmp.lt.s32.totalorder %s20, 0
        %s291 = ssub.s32 0, %s20
        %s292 = scalar_select %p290, %s291, %s20
        %s293 = sand.u32 %s292, 7
        %s294 = ssub.s32 0, %s293
        %s295 = scalar_select %p290, %s294, %s293
        %p296 = scmp.ne.s32.totalorder %s295, 0
        %p297 = scmp.lt.s32.totalorder %s295, 0
        %p298 = pnand %p297, %p296
        %p299 = pneg %p298
        %s300 = sadd.s32 %s295, 8
        %s301 = scalar_select %p299, %s300, %s295
        %p302 = scmp.lt.s32.totalorder %s301, 7
        %s303 = scalar_select %p302, %s301, 7
        %s304 = smul.addr %s303, 2
        %s305 = scalar_lea.vmem %s1, %s304
        %p306 = pneg %p91
        %p307 = pneg %p88
        %p308 = scmp.lt.s32.totalorder %s20, 0
        %s309 = ssub.s32 0, %s20
        %s310 = scalar_select %p308, %s309, %s20
        %s311 = sand.u32 %s310, 7
        %s312 = ssub.s32 0, %s311
        %s313 = scalar_select %p308, %s312, %s311
        %p314 = scmp.ne.s32.totalorder %s313, 0
        %p315 = scmp.lt.s32.totalorder %s313, 0
        %p316 = pnand %p315, %p314
        %p317 = pneg %p316
        %s318 = sadd.s32 %s313, 8
        %s319 = scalar_select %p317, %s318, %s313
        %p320 = scmp.lt.s32.totalorder %s319, 7
        %s321 = scalar_select %p320, %s319, 7
        %s322 = smul.addr %s321, 2
        %s323 = scalar_lea.vmem %s2, %s322
        %p324 = pneg %p141
        %p325 = pneg %p138
        %p326 = pneg %p167
        %p327 = pneg %p164
        %s328 = sand.u32 %s154, 1
        %s329 = scalar_lea.sflag [#allocation4], %s328
        %s330 = sand.u32 %s154, 1
        %s331 = smul.addr %s330, 4
        %s332 = scalar_lea.vmem [#allocation5], %s331
        %p333 = scmp.lt.s32.totalorder %s20, 0
        %s334 = ssub.s32 0, %s20
        %s335 = scalar_select %p333, %s334, %s20
        %s336 = sand.u32 %s335, 7
        %s337 = ssub.s32 0, %s336
        %s338 = scalar_select %p333, %s337, %s336
        %p339 = scmp.ne.s32.totalorder %s338, 0
        %p340 = scmp.lt.s32.totalorder %s338, 0
        %p341 = pnand %p340, %p339
        %p342 = pneg %p341
        %s343 = sadd.s32 %s338, 8
        %s344 = scalar_select %p342, %s343, %s338
        %p345 = scmp.lt.s32.totalorder %s344, 7
        %s346 = scalar_select %p345, %s344, 7
        %s347 = smul.addr %s346, 2
        %s348 = scalar_lea.vmem %s1, %s347
        %p349 = scmp.lt.s32.totalorder %s20, 0
        %s350 = ssub.s32 0, %s20
        %s351 = scalar_select %p349, %s350, %s20
        %s352 = sand.u32 %s351, 7
        %s353 = ssub.s32 0, %s352
        %s354 = scalar_select %p349, %s353, %s352
        %p355 = scmp.ne.s32.totalorder %s354, 0
        %p356 = scmp.lt.s32.totalorder %s354, 0
        %p357 = pnand %p356, %p355
        %p358 = pneg %p357
        %s359 = sadd.s32 %s354, 8
        %s360 = scalar_select %p358, %s359, %s354
        %p361 = scmp.lt.s32.totalorder %s20, 0
        %s362 = ssub.s32 0, %s20
        %s363 = scalar_select %p361, %s362, %s20
        %s364 = sand.u32 %s363, 7
        %s365 = ssub.s32 0, %s364
        %s366 = scalar_select %p361, %s365, %s364
        %p367 = scmp.ne.s32.totalorder %s366, 0
        %p368 = scmp.lt.s32.totalorder %s366, 0
        %p369 = pnand %p368, %p367
        %p370 = pneg %p369
        %s371 = sadd.s32 %s366, 8
        %s372 = scalar_select %p370, %s371, %s366
        %p373 = scmp.lt.s32.totalorder %s372, 7
        %s374 = scalar_select %p373, %s372, 7
        %s375 = smul.addr %s374, 2
        %s376 = scalar_lea.vmem %s2, %s375
        %p377 = scmp.lt.s32.totalorder %s20, 0
        %s378 = ssub.s32 0, %s20
        %s379 = scalar_select %p377, %s378, %s20
        %s380 = sand.u32 %s379, 7
        %s381 = ssub.s32 0, %s380
        %s382 = scalar_select %p377, %s381, %s380
        %p383 = scmp.ne.s32.totalorder %s382, 0
        %p384 = scmp.lt.s32.totalorder %s382, 0
        %p385 = pnand %p384, %p383
        %p386 = pneg %p385
        %s387 = sadd.s32 %s382, 8
        %s388 = scalar_select %p386, %s387, %s382
        %v389 = vld [vmem:[%s278] sm:$0xf]
        %v392 = vunpack.c.l.s4 1983009808
        %v393 = vunpack.c.0.s8 %v392
        %v394 = vlaneseq
        %v395 = vshrl.u32 %v394, 7
        %v396 = vsub.s32 %v393, %v395
        %v397 = vrot.slane %v389, %v396
        %v398 = vcombine.high %v397, %v397
        %vm401 = vcmask 1041408
        %v402 = vsel %vm401, %v397, 0.0
        %v403 = vsel %vm401, %v398, 0.0
        %v404 = vadd.f32 %v402, %v403
        %405 = vadd.xlane.f32.xlu0 %v404
        %v406 = vpop.xlane.xlu0 %405
        %v407 = vrot.slane %v406, 4
        %v408 = vadd.f32 %v406, %v407
        %v409 = vrot.slane %v408, 2
        %v410 = vadd.f32 %v408, %v409
        %v411 = vrot.slane %v410, 1
        %v412 = vadd.f32 %v410, %v411
        %s413 = vtos %v412
        %v414 = vmul.f32 %v389, %v389
        %v417 = vunpack.c.l.s4 1983009808
        %v418 = vunpack.c.0.s8 %v417
        %v419 = vlaneseq
        %v420 = vshrl.u32 %v419, 7
        %v421 = vsub.s32 %v418, %v420
        %v422 = vrot.slane %v414, %v421
        %v423 = vcombine.high %v422, %v422
        %v426 = vsel %vm401, %v422, 0.0
        %v427 = vsel %vm401, %v423, 0.0
        %v428 = vadd.f32 %v426, %v427
        %429 = vadd.xlane.f32.xlu0 %v428
        %v430 = vpop.xlane.xlu0 %429
        %v431 = vrot.slane %v430, 4
        %v432 = vadd.f32 %v430, %v431
        %v433 = vrot.slane %v432, 2
        %v434 = vadd.f32 %v432, %v433
        %v435 = vrot.slane %v434, 1
        %v436 = vadd.f32 %v434, %v435
        %s437 = vtos %v436
        %s438 = smul.f32 %s413, 0.001953125
        %s439 = smul.f32 %s437, 0.001953125
        %s440 = smul.f32 %s438, %s438
        %s441 = ssub.f32 %s439, %s440
        %s442 = smax.f32 %s441, 0.0
        %s443 = sadd.f32 %s442, 1e-05
        %v444 = vstv %s443
        %v445 = vrsqrt.pop %v444
        %s446 = vtos %v445
        %v447 = vld [vmem:[%s348] sm:$0x3]
        %v448 = vld [vmem:[%s376] sm:$0x3]
        %v449 = vstv %s446
        %v450 = vmul.f32 %v447, %v449
        %v451 = vstv %s438
        %v452 = vmul.f32 %v451, %v450
        %v453 = vsub.f32 %v448, %v452
        %455 = vset.pattern.permute.xlu0 0
        %456 = vperm.xlu0 %455, %v450
        %v457 = vpop.permute.xlu0 %456
        %v459 = vunpack.c.l.s4 269488144
        %v460 = vunpack.c.0.s8 %v459
        %v461 = vlaneseq
        %v462 = vshrl.u32 %v461, 7
        %v463 = vsub.s32 %v460, %v462
        %v464 = vrot.slane %v457, %v463
        %v466 = vmul.f32 %v389, %v464
        %468 = vset.pattern.permute.xlu0 0
        %469 = vperm.xlu0 %468, %v453
        %v470 = vpop.permute.xlu0 %469
        %v472 = vunpack.c.l.s4 269488144
        %v473 = vunpack.c.0.s8 %v472
        %v474 = vlaneseq
        %v475 = vshrl.u32 %v474, 7
        %v476 = vsub.s32 %v473, %v475
        %v477 = vrot.slane %v470, %v476
        %v479 = vadd.f32 %v466, %v477
        %480 = vst [vmem:[%s332] sm:$0xf] %v479
        %s481 = sand.u32 %s154, 1
        %s482 = scalar_lea.sflag [#allocation4], %s481
        %s483 = sand.u32 %s154, 1
        %s484 = smul.addr %s483, 4
        %s485 = scalar_lea.vmem [#allocation5], %s484
        // Predicated region
        $region37: #{tpu_custom_call.1} parent=31 // pred_check
          %p486 = pneg %p164
        $region38: #{tpu_custom_call.1} parent=31 // pred_check_branch
          %488 = sbr.rel (%p486) target = $region40
        $region39: #{tpu_custom_call.1} parent=31 // pred_region
          %s490 = ssub.s32 64, 64
          %491 = vsyncadd %s482, %s490
          %s492 = smul.addr %s20, 2
          %s493 = smul.addr %s492, 32
          %s494 = scalar_lea.hbm %s3, %s493
          %s496 = sshll.u32 %s485, 4
          %s497 = int_to_ptr.vmem [resolvable:$true] %s496
          %499 = dma.vmem_to_hbm [thread:$0]  %s497, 64, %s494, %s482
        $region40: #{tpu_custom_call.1} parent=31 // pred_fallthru
          _
      $region32: #{tpu_custom_call.1} parent=5 // pred_fallthru
        _
      %p500 = scmp.le.s32.totalorder 2, %s15
      // Predicated region
      $region41: #{tpu_custom_call.1} parent=5 // pred_check
        %p501 = pneg %p500
      $region42: #{tpu_custom_call.1} parent=5 // pred_check_branch
        %503 = sbr.rel (%p501) target = $region44
      $region43: #{tpu_custom_call.1} parent=5 // pred_region
        %s504 = ssub.s32 %s15, 2
        // Predicated region
        $region45: #{tpu_custom_call.1} parent=43 // pred_check
          %p505 = pneg %p170
        $region46: #{tpu_custom_call.1} parent=43 // pred_check_branch
          %507 = sbr.rel (%p505) target = $region48
        $region47: #{tpu_custom_call.1} parent=43 // pred_region
          %s508 = sand.u32 %s155, 1
          %s509 = scalar_lea.sflag [#allocation4], %s508
          %s510 = sand.u32 %s155, 1
          %s511 = smul.addr %s510, 4
          %s512 = scalar_lea.vmem [#allocation5], %s511
          %513 = dma.done %s509, 64
        $region48: #{tpu_custom_call.1} parent=43 // pred_fallthru
          _
      $region44: #{tpu_custom_call.1} parent=5 // pred_fallthru
        _
    $region6: #{tpu_custom_call.1} parent=1 // loop_footer
      %s19 = sadd.s32 1, %s15
    $region7: #{tpu_custom_call.1} parent=1 // loop_footer_branch
      %14 = sbr.rel target = $region3
    $region8: #{tpu_custom_call.1} parent=1 // loop_exit
      _
    %514 = vsyncpa [#allocation3], 1
    %s515 = scalar_lea.sflag [#allocation3], 1
    %516 = vsyncpa %s515, 1
    %517 = vsyncpa [#allocation4], 1
    %s518 = scalar_lea.sflag [#allocation4], 1
    %519 = vsyncpa %s518, 1

</llo_original>
